<compile_context>
chip_gen: v5e
topology: v5e:2x2
jax: 0.10.0
libtpu: 0.0.40
codegen_flags: <defaults>
</compile_context>

<pallas_src>
import math
import functools

import jax
import jax.numpy as jnp
from jax.experimental import pallas as pl
from jax.experimental.pallas import tpu as pltpu


# ---------------------------------------------------------------------------
# Parameter (buffer) construction — plain-JAX glue, deterministic.
# ---------------------------------------------------------------------------
def make_positional_encoding_table(d_model: int, max_len: int = 5000,
                                   dtype=jnp.float32) -> jax.Array:
    """Reproduces the `pe` buffer from PositionalEncoding.__init__ exactly."""
    position = jnp.arange(max_len, dtype=jnp.float32)[:, None]            # (L, 1)
    div_term = jnp.exp(jnp.arange(0, d_model, 2, dtype=jnp.float32)
                       * (-math.log(10000.0) / d_model))                  # (D/2,)
    pe = jnp.zeros((max_len, 1, d_model), dtype=jnp.float32)
    pe = pe.at[:, 0, 0::2].set(jnp.sin(position * div_term))
    pe = pe.at[:, 0, 1::2].set(jnp.cos(position * div_term))
    return pe.astype(dtype)                                               # (L, 1, D)


# ---------------------------------------------------------------------------
# Pallas kernel: lane-dense add (pe lane-repeated over batch) + opt. dropout.
# ---------------------------------------------------------------------------
def _posenc_kernel(seed_ref, x_ref, pe_ref, o_ref, *,
                   batch: int, rate: float, training: bool):
    # x_ref:  (ts, B*D) VMEM tile  (lane-dense: flat index = b*D + d)
    # pe_ref: (ts, D)   VMEM tile  -> repeated B times along lanes
    pe_rep = jnp.tile(pe_ref[...], (1, batch))          # (ts, B*D)
    y = x_ref[...] + pe_rep

    if training and rate > 0.0:
        # Inverted dropout with the on-chip PRNG (deterministic per seed/block).
        # NOTE: does not replicate torch's RNG stream bit-for-bit (impossible),
        # and the mask depends on block_seq / grid split; eval mode matches
        # PyTorch exactly.
        pltpu.prng_seed(seed_ref[0] + pl.program_id(0))
        bits = pltpu.bitcast(pltpu.prng_random_bits(y.shape), jnp.uint32)
        threshold = jnp.uint32(min(int(rate * (1 << 32)), (1 << 32) - 1))
        keep = bits >= threshold                         # P(keep) = 1 - rate
        scale = jnp.asarray(1.0 / (1.0 - rate), y.dtype)
        y = y * jnp.where(keep, scale, jnp.zeros_like(scale))

    o_ref[...] = y


def positional_encoding(x: jax.Array, pe: jax.Array, *,
                        dropout_rate: float = 0.1,
                        training: bool = False,
                        seed: int = 0,
                        block_seq: int | None = None) -> jax.Array:
    """Apply PositionalEncoding.forward to x of shape (S, B, D)."""
    S, B, D = x.shape

    # Lane-dense views / dtype alignment (done in the wrapper; these reshapes
    # are free views for contiguous trailing dims).
    pe_s = pe[:S, 0, :].astype(x.dtype)                  # (S, D)
    x2 = x.reshape(S, B * D)                             # (S, B*D)

    itemsize = jnp.dtype(x.dtype).itemsize
    row_bytes = B * D * itemsize

    # --- Tile-size selection: target ~4 MiB x tile, multiple of 8 rows. ---
    if block_seq is None:
        target_bytes = 4 << 20
        block_seq = max(8, ((target_bytes // row_bytes) // 8) * 8)
    if block_seq >= S:
        block_seq = S                                    # full extent: always legal
    else:
        block_seq = max(8, (block_seq // 8) * 8)         # keep (8, ·) alignment

    grid = (pl.cdiv(S, block_seq),)

    # --- VMEM budget: double-buffered x-in + out + pe tiles (+ slack). ---
    x_tile_bytes = block_seq * row_bytes
    pe_tile_bytes = block_seq * D * itemsize
    vmem_need = 2 * (2 * x_tile_bytes + pe_tile_bytes) + (2 << 20)
    vmem_limit = max(32 << 20, vmem_need)                # raise v5e's 16 MiB default

    kernel = functools.partial(_posenc_kernel, batch=B,
                               rate=float(dropout_rate),
                               training=bool(training))

    seed_arr = jnp.asarray([seed], dtype=jnp.int32)

    out = pl.pallas_call(
        kernel,
        out_shape=jax.ShapeDtypeStruct((S, B * D), x.dtype),
        grid_spec=pltpu.PrefetchScalarGridSpec(
            num_scalar_prefetch=1,
            grid=grid,
            in_specs=[
                pl.BlockSpec((block_seq, B * D), lambda i, seed: (i, 0)),
                pl.BlockSpec((block_seq, D), lambda i, seed: (i, 0)),
            ],
            out_specs=pl.BlockSpec((block_seq, B * D), lambda i, seed: (i, 0)),
        ),
        compiler_params=pltpu.CompilerParams(
            dimension_semantics=("parallel",),           # blocks independent; uses both v7x TCs
            vmem_limit_bytes=int(vmem_limit)),
    )(seed_arr, x2, pe_s)

    return out.reshape(S, B, D)


# ---------------------------------------------------------------------------
# Demo / self-check
# ---------------------------------------------------------------------------
if __name__ == "__main__":
    SEQ, BATCH, D_MODEL = 8, 2, 32

    key = jax.random.PRNGKey(0)
    x = jax.random.normal(key, (SEQ, BATCH, D_MODEL), dtype=jnp.float32)

    pe = make_positional_encoding_table(D_MODEL, max_len=64)

    # Eval-mode forward (dropout is identity), matches PyTorch model.eval().
    y = positional_encoding(x, pe, dropout_rate=0.1, training=False)
    y = jax.block_until_ready(y)

    y_ref = x + pe[:SEQ]
    assert y.shape == (SEQ, BATCH, D_MODEL)
    assert jnp.allclose(y, y_ref, atol=1e-6, rtol=1e-6)

    # Secondary check: multi-block grid with a padded last block.
    S2 = 40
    x2 = jax.random.normal(jax.random.PRNGKey(1), (S2, BATCH, D_MODEL),
                           dtype=jnp.float32)
    y2 = positional_encoding(x2, pe, dropout_rate=0.1, training=False,
                             block_seq=16)
    y2 = jax.block_until_ready(y2)
    y2_ref = x2 + pe[:S2]
    assert jnp.allclose(y2, y2_ref, atol=1e-6, rtol=1e-6)

    print("KERNEL_OK")
</pallas_src>

<mosaic_0001>
module attributes {stable_mosaic.version = 11 : i64} {
  func.func @_posenc_kernel(%arg0: i32, %arg1: memref<1xi32, #tpu.memory_space<smem>>, %arg2: memref<8x64xf32, #tpu.memory_space<vmem>>, %arg3: memref<8x32xf32, #tpu.memory_space<vmem>>, %arg4: memref<8x64xf32, #tpu.memory_space<vmem>>) attributes {dimension_semantics = [#tpu.dimension_semantics<parallel>], iteration_bounds = array<i64: 1>, scalar_prefetch = 1 : i64, scratch_operands = 0 : i64, tpu.core_type = #tpu.core_type<tc>, window_params = [{transform_indices = @transform_0, window_bounds = array<i64: 8, 64>}, {transform_indices = @transform_1, window_bounds = array<i64: 8, 32>}, {transform_indices = @transform_2, window_bounds = array<i64: 8, 64>}]} {
    %c0 = arith.constant 0 : index
    %c0_0 = arith.constant 0 : index
    %0 = vector.load %arg3[%c0, %c0_0] : memref<8x32xf32, #tpu.memory_space<vmem>>, vector<8x32xf32>
    %1 = tpu.concatenate %0, %0 in 1 : vector<8x32xf32>, vector<8x32xf32> -> vector<8x64xf32>
    %c0_1 = arith.constant 0 : index
    %c0_2 = arith.constant 0 : index
    %2 = vector.load %arg2[%c0_1, %c0_2] : memref<8x64xf32, #tpu.memory_space<vmem>>, vector<8x64xf32>
    %3 = arith.addf %2, %1 : vector<8x64xf32>
    %c0_3 = arith.constant 0 : index
    %c0_4 = arith.constant 0 : index
    %4 = vector.load %arg4[%c0_3, %c0_4] : memref<8x64xf32, #tpu.memory_space<vmem>>, vector<8x64xf32>
    tpu.vector_store %arg4[%c0_3, %c0_4], %3 {strides = array<i32>} : memref<8x64xf32, #tpu.memory_space<vmem>>, vector<8x64xf32>,
    return
  }
  func.func @transform_0(%arg0: i32, %arg1: memref<1xi32, #tpu.memory_space<smem>>) -> (i32, i32) {
    %c0_i32 = arith.constant 0 : i32
    %c0_i32_0 = arith.constant 0 : i32
    return %arg0, %c0_i32 : i32, i32
  }
  func.func @transform_1(%arg0: i32, %arg1: memref<1xi32, #tpu.memory_space<smem>>) -> (i32, i32) {
    %c0_i32 = arith.constant 0 : i32
    %c0_i32_0 = arith.constant 0 : i32
    return %arg0, %c0_i32 : i32, i32
  }
  func.func @transform_2(%arg0: i32, %arg1: memref<1xi32, #tpu.memory_space<smem>>) -> (i32, i32) {
    %c0_i32 = arith.constant 0 : i32
    %c0_i32_0 = arith.constant 0 : i32
    return %arg0, %c0_i32 : i32, i32
  }
}

</mosaic_0001>

<llo_original>
// kernel: tpu_custom_call.1
$region0: #{tpu_custom_call.1}
  #allocation0 [shape = 'u32[]', space=smem, size = 0x4, offset = 0x4, fixed_abs, tag = 'smem constant byte address 0x4 - core index']
  #allocation1 [shape = 'u32[72,128]{1,0:T(1,128)}', space=vmem, size = 0x9000, scoped, tag = 'internal scratch']
  #allocation2 [shape = 's32[1]{0}', space=sflag, size = 0x4, scoped, tag = 'scoped memory for tpu_custom_call.1']
  #allocation3 [shape = 's32[1]{0:T(128)S(6)}', space=smem, size = 0x200, scoped, tag = 'prefetched SMEM operand 0']
  %s0 = inlined_call_operand.<no memory space> [shape: s32[1], index: 0, kind: input, shape index: {}]
  %s1 = inlined_call_operand.hbm [shape: f32[8,64], index: 1, kind: input, shape index: {}]
  %s2 = inlined_call_operand.hbm [shape: f32[8,32], index: 2, kind: input, shape index: {}]
  %s3 = inlined_call_operand.hbm [shape: f32[8,64], index: 3, kind: output, shape index: {}]
  %s4 = sld [smem:[#allocation0]]
  $region26: #{tpu_custom_call.1} parent=0
    _
  %s6 = ssub.s32 1, %s4
  %s7 = scalar_select 0, %s6, %s4
  %8 = sst [smem:[#allocation3]] %s0
  $region1: #{tpu_custom_call.1} parent=0
    #allocation4 [shape = 'u8[4096]{0}', space=vmem, size = 0x1000, scoped, tag = 'input window, operand 1, single buffered']
    #allocation5 [shape = 's32[1]{0}', space=sflag, size = 0x4, scoped, tag = 'scoped memory for tpu_custom_call.1']
    #allocation6 [shape = 's32[1]{0}', space=sflag, size = 0x4, scoped, tag = 'scoped memory for tpu_custom_call.1']
    #allocation7 [shape = 'u8[4096]{0}', space=vmem, size = 0x1000, scoped, tag = 'input window, operand 2, single buffered']
    #allocation8 [shape = 's32[1]{0}', space=sflag, size = 0x4, scoped, tag = 'scoped memory for tpu_custom_call.1']
    #allocation9 [shape = 'u8[4096]{0}', space=vmem, size = 0x1000, scoped, tag = 'output window, operand 0, single buffered']
    %9 = vsyncpa [#allocation5], 0
    %10 = vsyncpa [#allocation8], 0
    %11 = vsyncpa [#allocation6], 0
    // Predicated region
    $region2: #{tpu_custom_call.1} parent=1 // pred_check
      _
    $region3: #{tpu_custom_call.1} parent=1 // pred_check_branch
      %13 = sbr.rel (0) target = $region5
    $region4: #{tpu_custom_call.1} parent=1 // pred_region
      %15 = vsyncadd [#allocation5], 0
      %s17 = sshll.u32 %s1, 4
      %s18 = int_to_ptr.hbm [resolvable:$true] %s17
      %s19 = sshll.u32 [#allocation4], 4
      %s20 = int_to_ptr.vmem [resolvable:$true] %s19
      %22 = dma.hbm_to_vmem [thread:$0]  %s18, 128, %s20, [#allocation5]
    $region5: #{tpu_custom_call.1} parent=1 // pred_fallthru
      _
    // Predicated region
    $region6: #{tpu_custom_call.1} parent=1 // pred_check
      _
    $region7: #{tpu_custom_call.1} parent=1 // pred_check_branch
      %24 = sbr.rel (0) target = $region9
    $region8: #{tpu_custom_call.1} parent=1 // pred_region
      %26 = vsyncadd [#allocation8], 0
      %s28 = sshll.u32 %s2, 4
      %s29 = int_to_ptr.hbm [resolvable:$true] %s28
      %s30 = sshll.u32 [#allocation7], 4
      %s31 = int_to_ptr.vmem [resolvable:$true] %s30
      %33 = dma.hbm_to_vmem [thread:$0]  %s29, 128, %s31, [#allocation8]
    $region9: #{tpu_custom_call.1} parent=1 // pred_fallthru
      _
    // Predicated region
    $region10: #{tpu_custom_call.1} parent=1 // pred_check
      _
    $region11: #{tpu_custom_call.1} parent=1 // pred_check_branch
      %35 = sbr.rel (0) target = $region13
    $region12: #{tpu_custom_call.1} parent=1 // pred_region
      %37 = dma.done [#allocation5], 128
    $region13: #{tpu_custom_call.1} parent=1 // pred_fallthru
      _
    // Predicated region
    $region14: #{tpu_custom_call.1} parent=1 // pred_check
      _
    $region15: #{tpu_custom_call.1} parent=1 // pred_check_branch
      %39 = sbr.rel (0) target = $region17
    $region16: #{tpu_custom_call.1} parent=1 // pred_region
      %41 = dma.done [#allocation8], 128
    $region17: #{tpu_custom_call.1} parent=1 // pred_fallthru
      _
    %v42 = vld [vmem:[#allocation7] sm:$0xff]
    %44 = vrot.lane.b32.xlu0 %v42, 32
    %v45 = vpop.permute.xlu0 %44
    %vm47 = vcmask 261120
    %v48 = vsel %vm47, %v42, %v45
    %v49 = vld [vmem:[#allocation4] sm:$0xff]
    %v50 = vadd.f32 %v49, %v48
    %vm51 = vcmask 523264
    %52 = vst.msk [vmem:[#allocation9] sm:$0xff] %vm51, %v50
    // Predicated region
    $region18: #{tpu_custom_call.1} parent=1 // pred_check
      _
    $region19: #{tpu_custom_call.1} parent=1 // pred_check_branch
      %54 = sbr.rel (0) target = $region21
    $region20: #{tpu_custom_call.1} parent=1 // pred_region
      %56 = vsyncadd [#allocation6], 0
      %s58 = sshll.u32 [#allocation9], 4
      %s59 = int_to_ptr.vmem [resolvable:$true] %s58
      %s60 = sshll.u32 %s3, 4
      %s61 = int_to_ptr.hbm [resolvable:$true] %s60
      %63 = dma.vmem_to_hbm [thread:$0]  %s59, 128, %s61, [#allocation6]
    $region21: #{tpu_custom_call.1} parent=1 // pred_fallthru
      _
    // Predicated region
    $region22: #{tpu_custom_call.1} parent=1 // pred_check
      _
    $region23: #{tpu_custom_call.1} parent=1 // pred_check_branch
      %65 = sbr.rel (0) target = $region25
    $region24: #{tpu_custom_call.1} parent=1 // pred_region
      %67 = dma.done [#allocation6], 128
    $region25: #{tpu_custom_call.1} parent=1 // pred_fallthru
      _
    %68 = vsyncpa [#allocation5], 1
    %69 = vsyncpa [#allocation8], 1
    %70 = vsyncpa [#allocation6], 1

</llo_original>
